<compile_context>
chip_gen: v6e
topology: v6e:2x2x1
jax: 0.10.0
libtpu: 0.0.40
codegen_flags: <defaults>
</compile_context>

<pallas_src>
import jax
import jax.numpy as jnp
from jax import lax
from jax.experimental import pallas as pl
from jax.experimental.pallas import tpu as pltpu


def _make_resblock_kernel(Cin, Cout, L, has_downsample):
    """Build a kernel closure for static (Cin, Cout, L, has_downsample)."""
    K = 3

    def _body(x_ref, w1_ref, b1_ref, w2_ref, b2_ref, wd_ref, bd_ref,
              out_ref, xh_ref, hh_ref):
        # x_ref : (1, Cin, L)       one batch element (lane axis = L)
        # w1_ref: (Cout, Cin*3)     tap index ci*3 + k
        # w2_ref: (Cout, Cout*3)    tap index c2*3 + k
        # b*_ref: (Cout, 1)
        # wd_ref: (Cout, Cin) / bd_ref: (Cout, 1)   (only if has_downsample)
        # xh_ref: (Cin,  L+2) VMEM scratch  (x with 1-column zero halo)
        # hh_ref: (Cout, L+2) VMEM scratch  (ReLU(conv1) with 1-column zero halo)
        xin = x_ref[0]                                   # (Cin, L)

        # zero only the two halo columns, write x into the interior view
        zin = jnp.zeros((Cin, 1), jnp.float32)
        xh_ref[:, 0:1] = zin
        xh_ref[:, L + 1:L + 2] = zin
        xh_ref[:, 1:1 + L] = xin

        zh = jnp.zeros((Cout, 1), jnp.float32)
        hh_ref[:, 0:1] = zh
        hh_ref[:, L + 1:L + 2] = zh

        # ---- conv1 (k=3, p=1) + bias + ReLU : pure VPU broadcast mul-adds ----
        h = b1_ref[...]                                  # (Cout, 1) -> broadcasts
        for ci in range(Cin):
            for k in range(K):
                h = h + (w1_ref[:, ci * K + k:ci * K + k + 1] *
                         xh_ref[ci:ci + 1, k:k + L])     # (Cout,1)*(1,L)->(Cout,L)
        hh_ref[:, 1:1 + L] = jnp.maximum(h, 0.0)

        # ---- conv2 (k=3, p=1) + bias ----
        y = b2_ref[...]                                  # (Cout, 1)
        for c2 in range(Cout):
            for k in range(K):
                y = y + (w2_ref[:, c2 * K + k:c2 * K + k + 1] *
                         hh_ref[c2:c2 + 1, k:k + L])

        # ---- residual branch ----
        if has_downsample:
            d = bd_ref[...]                              # (Cout, 1)
            for ci in range(Cin):
                d = d + wd_ref[:, ci:ci + 1] * xin[ci:ci + 1, :]
            y = y + d
        else:
            # Cin == Cout: identity shortcut, no matmul / no eye matrix.
            y = y + xin

        out_ref[0] = y                                   # lane-dense store (L lanes)

    if has_downsample:
        def kernel(x_ref, w1_ref, b1_ref, w2_ref, b2_ref, wd_ref, bd_ref,
                   out_ref, xh_ref, hh_ref):
            _body(x_ref, w1_ref, b1_ref, w2_ref, b2_ref, wd_ref, bd_ref,
                  out_ref, xh_ref, hh_ref)
    else:
        def kernel(x_ref, w1_ref, b1_ref, w2_ref, b2_ref,
                   out_ref, xh_ref, hh_ref):
            _body(x_ref, w1_ref, b1_ref, w2_ref, b2_ref, None, None,
                  out_ref, xh_ref, hh_ref)
    return kernel


def resblock_forward(x_ncl, w1, b1, w2, b2, wd=None, bd=None):
    """x_ncl: (N, Cin, L) f32 (PyTorch NCL layout, kept end-to-end).
    w1: (Cout, Cin, 3), w2: (Cout, Cout, 3), wd: (Cout, Cin) or None, b*: (Cout,).
    Returns (N, Cout, L)."""
    N, Cin, L = x_ncl.shape
    Cout = w1.shape[0]
    has_downsample = wd is not None

    x = jnp.asarray(x_ncl, jnp.float32)
    w1_p = jnp.asarray(w1, jnp.float32).reshape(Cout, Cin * 3)
    w2_p = jnp.asarray(w2, jnp.float32).reshape(Cout, Cout * 3)
    b1_p = jnp.asarray(b1, jnp.float32).reshape(Cout, 1)
    b2_p = jnp.asarray(b2, jnp.float32).reshape(Cout, 1)

    def const_spec(shape):  # small parameters, same block every grid step
        return pl.BlockSpec(shape, lambda n, _s=len(shape): (0,) * _s)

    in_specs = [
        pl.BlockSpec((1, Cin, L), lambda n: (n, 0, 0)),   # per-batch x tile
        const_spec((Cout, Cin * 3)),
        const_spec((Cout, 1)),
        const_spec((Cout, Cout * 3)),
        const_spec((Cout, 1)),
    ]
    args = [x, w1_p, b1_p, w2_p, b2_p]
    if has_downsample:
        wd_p = jnp.asarray(wd, jnp.float32).reshape(Cout, Cin)
        bd_p = jnp.asarray(bd, jnp.float32).reshape(Cout, 1)
        in_specs += [const_spec((Cout, Cin)), const_spec((Cout, 1))]
        args += [wd_p, bd_p]

    kernel = _make_resblock_kernel(Cin, Cout, L, has_downsample)

    return pl.pallas_call(
        kernel,
        out_shape=jax.ShapeDtypeStruct((N, Cout, L), jnp.float32),
        grid=(N,),
        in_specs=in_specs,
        out_specs=pl.BlockSpec((1, Cout, L), lambda n: (n, 0, 0)),
        scratch_shapes=[pltpu.VMEM((Cin, L + 2), jnp.float32),    # x + halo
                        pltpu.VMEM((Cout, L + 2), jnp.float32)],  # relu(conv1) + halo
        compiler_params=pltpu.CompilerParams(
            dimension_semantics=("parallel",)),  # shard batch across v7x's 2 TCs
    )(*args)


def resblock_reference(x, w1, b1, w2, b2, wd=None, bd=None):
    """Pure-JAX reference mirroring the PyTorch module."""
    dn = ("NCH", "OIH", "NCH")
    h = lax.conv_general_dilated(x, w1, (1,), [(1, 1)], dimension_numbers=dn)
    h = jnp.maximum(h + b1[None, :, None], 0.0)
    y = lax.conv_general_dilated(h, w2, (1,), [(1, 1)], dimension_numbers=dn)
    y = y + b2[None, :, None]
    if wd is None:
        down = x
    else:
        down = lax.conv_general_dilated(x, wd[:, :, None], (1,), [(0, 0)],
                                        dimension_numbers=dn) + bd[None, :, None]
    return y + down


if __name__ == "__main__":
    # Module defaults: input_channel=1, output_channel=4 (downsample branch active).
    N, Cin, Cout, L = 2, 1, 4, 16

    key = jax.random.PRNGKey(0)
    ks = jax.random.split(key, 8)
    x = jax.random.normal(ks[0], (N, Cin, L), jnp.float32)

    # Deterministic synthetic parameters (PyTorch Conv1d weight layout: (Cout, Cin, K)).
    w1 = jax.random.normal(ks[1], (Cout, Cin, 3), jnp.float32) * 0.3
    b1 = jax.random.normal(ks[2], (Cout,), jnp.float32) * 0.1
    w2 = jax.random.normal(ks[3], (Cout, Cout, 3), jnp.float32) * 0.3
    b2 = jax.random.normal(ks[4], (Cout,), jnp.float32) * 0.1
    wd = jax.random.normal(ks[5], (Cout, Cin), jnp.float32) * 0.3
    bd = jax.random.normal(ks[6], (Cout,), jnp.float32) * 0.1

    out = jax.block_until_ready(resblock_forward(x, w1, b1, w2, b2, wd, bd))
    ref = resblock_reference(x, w1, b1, w2, b2, wd, bd)
    assert out.shape == (N, Cout, L)
    assert jnp.allclose(out, ref, atol=1e-5, rtol=1e-5), "mismatch vs reference (downsample)"

    # Identity-shortcut variant (Cin == Cout): exercises the no-downsample kernel.
    Cid = 4
    x2 = jax.random.normal(ks[7], (N, Cid, L), jnp.float32)
    w1i = jax.random.normal(ks[1], (Cid, Cid, 3), jnp.float32) * 0.3
    w2i = jax.random.normal(ks[3], (Cid, Cid, 3), jnp.float32) * 0.3
    out2 = jax.block_until_ready(resblock_forward(x2, w1i, b1, w2i, b2))
    ref2 = resblock_reference(x2, w1i, b1, w2i, b2)
    assert jnp.allclose(out2, ref2, atol=1e-5, rtol=1e-5), "mismatch vs reference (identity)"

    print("KERNEL_OK")
</pallas_src>

<mosaic_0001>
module attributes {stable_mosaic.version = 11 : i64} {
  func.func @kernel(%arg0: i32, %arg1: memref<1x1x16xf32, #tpu.memory_space<vmem>>, %arg2: memref<4x3xf32, #tpu.memory_space<vmem>>, %arg3: memref<4x1xf32, #tpu.memory_space<vmem>>, %arg4: memref<4x12xf32, #tpu.memory_space<vmem>>, %arg5: memref<4x1xf32, #tpu.memory_space<vmem>>, %arg6: memref<4x1xf32, #tpu.memory_space<vmem>>, %arg7: memref<4x1xf32, #tpu.memory_space<vmem>>, %arg8: memref<1x4x16xf32, #tpu.memory_space<vmem>>, %arg9: memref<1x18xf32, #tpu.memory_space<vmem>>, %arg10: memref<4x18xf32, #tpu.memory_space<vmem>>) attributes {dimension_semantics = [#tpu.dimension_semantics<parallel>], iteration_bounds = array<i64: 2>, scalar_prefetch = 0 : i64, scratch_operands = 2 : i64, tpu.core_type = #tpu.core_type<tc>, window_params = [{transform_indices = @transform_0, window_bounds = array<i64: 1, 1, 16>}, {pipeline_mode = #tpu.pipeline_mode<synchronous>, transform_indices = @transform_1, window_bounds = array<i64: 4, 3>}, {pipeline_mode = #tpu.pipeline_mode<synchronous>, transform_indices = @transform_2, window_bounds = array<i64: 4, 1>}, {pipeline_mode = #tpu.pipeline_mode<synchronous>, transform_indices = @transform_3, window_bounds = array<i64: 4, 12>}, {pipeline_mode = #tpu.pipeline_mode<synchronous>, transform_indices = @transform_4, window_bounds = array<i64: 4, 1>}, {pipeline_mode = #tpu.pipeline_mode<synchronous>, transform_indices = @transform_5, window_bounds = array<i64: 4, 1>}, {pipeline_mode = #tpu.pipeline_mode<synchronous>, transform_indices = @transform_6, window_bounds = array<i64: 4, 1>}, {transform_indices = @transform_7, window_bounds = array<i64: 1, 4, 16>}]} {
    %c0 = arith.constant 0 : index
    %c0_0 = arith.constant 0 : index
    %c0_1 = arith.constant 0 : index
    %0 = vector.load %arg1[%c0, %c0_0, %c0_1] : memref<1x1x16xf32, #tpu.memory_space<vmem>>, vector<1x1x16xf32>
    %1 = vector.shape_cast %0 : vector<1x1x16xf32> to vector<1x16xf32>
    %cst = arith.constant 0.000000e+00 : f32
    %2 = vector.broadcast %cst : f32 to vector<1x1xf32>
    %c0_2 = arith.constant 0 : index
    %c0_3 = arith.constant 0 : index
    %3 = vector.load %arg9[%c0_2, %c0_3] : memref<1x18xf32, #tpu.memory_space<vmem>>, vector<1x1xf32>
    tpu.vector_store %arg9[%c0_2, %c0_3], %2 {strides = array<i32>} : memref<1x18xf32, #tpu.memory_space<vmem>>, vector<1x1xf32>,
    %c0_4 = arith.constant 0 : index
    %c17 = arith.constant 17 : index
    %4 = vector.load %arg9[%c0_4, %c17] : memref<1x18xf32, #tpu.memory_space<vmem>>, vector<1x1xf32>
    tpu.vector_store %arg9[%c0_4, %c17], %2 {strides = array<i32>} : memref<1x18xf32, #tpu.memory_space<vmem>>, vector<1x1xf32>,
    %c0_5 = arith.constant 0 : index
    %c1 = arith.constant 1 : index
    %5 = vector.load %arg9[%c0_5, %c1] : memref<1x18xf32, #tpu.memory_space<vmem>>, vector<1x16xf32>
    tpu.vector_store %arg9[%c0_5, %c1], %1 {strides = array<i32>} : memref<1x18xf32, #tpu.memory_space<vmem>>, vector<1x16xf32>,
    %cst_6 = arith.constant 0.000000e+00 : f32
    %6 = vector.broadcast %cst_6 : f32 to vector<4x1xf32>
    %c0_7 = arith.constant 0 : index
    %c0_8 = arith.constant 0 : index
    %7 = vector.load %arg10[%c0_7, %c0_8] : memref<4x18xf32, #tpu.memory_space<vmem>>, vector<4x1xf32>
    tpu.vector_store %arg10[%c0_7, %c0_8], %6 {strides = array<i32>} : memref<4x18xf32, #tpu.memory_space<vmem>>, vector<4x1xf32>,
    %c0_9 = arith.constant 0 : index
    %c17_10 = arith.constant 17 : index
    %8 = vector.load %arg10[%c0_9, %c17_10] : memref<4x18xf32, #tpu.memory_space<vmem>>, vector<4x1xf32>
    tpu.vector_store %arg10[%c0_9, %c17_10], %6 {strides = array<i32>} : memref<4x18xf32, #tpu.memory_space<vmem>>, vector<4x1xf32>,
    %c0_11 = arith.constant 0 : index
    %c0_12 = arith.constant 0 : index
    %9 = vector.load %arg3[%c0_11, %c0_12] : memref<4x1xf32, #tpu.memory_space<vmem>>, vector<4x1xf32>
    %c0_13 = arith.constant 0 : index
    %c0_14 = arith.constant 0 : index
    %10 = vector.load %arg2[%c0_13, %c0_14] : memref<4x3xf32, #tpu.memory_space<vmem>>, vector<4x1xf32>
    %c0_15 = arith.constant 0 : index
    %c0_16 = arith.constant 0 : index
    %11 = vector.load %arg9[%c0_15, %c0_16] : memref<1x18xf32, #tpu.memory_space<vmem>>, vector<1x16xf32>
    %12 = vector.broadcast %10 : vector<4x1xf32> to vector<4x16xf32>
    %13 = vector.broadcast %11 : vector<1x16xf32> to vector<4x16xf32>
    %14 = arith.mulf %12, %13 : vector<4x16xf32>
    %15 = vector.broadcast %9 : vector<4x1xf32> to vector<4x16xf32>
    %16 = arith.addf %15, %14 : vector<4x16xf32>
    %c0_17 = arith.constant 0 : index
    %c1_18 = arith.constant 1 : index
    %17 = vector.load %arg2[%c0_17, %c1_18] : memref<4x3xf32, #tpu.memory_space<vmem>>, vector<4x1xf32>
    %c0_19 = arith.constant 0 : index
    %c1_20 = arith.constant 1 : index
    %18 = vector.load %arg9[%c0_19, %c1_20] : memref<1x18xf32, #tpu.memory_space<vmem>>, vector<1x16xf32>
    %19 = vector.broadcast %17 : vector<4x1xf32> to vector<4x16xf32>
    %20 = vector.broadcast %18 : vector<1x16xf32> to vector<4x16xf32>
    %21 = arith.mulf %19, %20 : vector<4x16xf32>
    %22 = arith.addf %16, %21 : vector<4x16xf32>
    %c0_21 = arith.constant 0 : index
    %c2 = arith.constant 2 : index
    %23 = vector.load %arg2[%c0_21, %c2] : memref<4x3xf32, #tpu.memory_space<vmem>>, vector<4x1xf32>
    %c0_22 = arith.constant 0 : index
    %c2_23 = arith.constant 2 : index
    %24 = vector.load %arg9[%c0_22, %c2_23] : memref<1x18xf32, #tpu.memory_space<vmem>>, vector<1x16xf32>
    %25 = vector.broadcast %23 : vector<4x1xf32> to vector<4x16xf32>
    %26 = vector.broadcast %24 : vector<1x16xf32> to vector<4x16xf32>
    %27 = arith.mulf %25, %26 : vector<4x16xf32>
    %28 = arith.addf %22, %27 : vector<4x16xf32>
    %cst_24 = arith.constant 0.000000e+00 : f32
    %29 = vector.broadcast %cst_24 : f32 to vector<4x16xf32>
    %30 = arith.maximumf %28, %29 : vector<4x16xf32>
    %c0_25 = arith.constant 0 : index
    %c1_26 = arith.constant 1 : index
    %31 = vector.load %arg10[%c0_25, %c1_26] : memref<4x18xf32, #tpu.memory_space<vmem>>, vector<4x16xf32>
    tpu.vector_store %arg10[%c0_25, %c1_26], %30 {strides = array<i32>} : memref<4x18xf32, #tpu.memory_space<vmem>>, vector<4x16xf32>,
    %c0_27 = arith.constant 0 : index
    %c0_28 = arith.constant 0 : index
    %32 = vector.load %arg5[%c0_27, %c0_28] : memref<4x1xf32, #tpu.memory_space<vmem>>, vector<4x1xf32>
    %c0_29 = arith.constant 0 : index
    %c0_30 = arith.constant 0 : index
    %33 = vector.load %arg4[%c0_29, %c0_30] : memref<4x12xf32, #tpu.memory_space<vmem>>, vector<4x1xf32>
    %c0_31 = arith.constant 0 : index
    %c0_32 = arith.constant 0 : index
    %34 = vector.load %arg10[%c0_31, %c0_32] : memref<4x18xf32, #tpu.memory_space<vmem>>, vector<1x16xf32>
    %35 = vector.broadcast %33 : vector<4x1xf32> to vector<4x16xf32>
    %36 = vector.broadcast %34 : vector<1x16xf32> to vector<4x16xf32>
    %37 = arith.mulf %35, %36 : vector<4x16xf32>
    %38 = vector.broadcast %32 : vector<4x1xf32> to vector<4x16xf32>
    %39 = arith.addf %38, %37 : vector<4x16xf32>
    %c0_33 = arith.constant 0 : index
    %c1_34 = arith.constant 1 : index
    %40 = vector.load %arg4[%c0_33, %c1_34] : memref<4x12xf32, #tpu.memory_space<vmem>>, vector<4x1xf32>
    %c0_35 = arith.constant 0 : index
    %c1_36 = arith.constant 1 : index
    %41 = vector.load %arg10[%c0_35, %c1_36] : memref<4x18xf32, #tpu.memory_space<vmem>>, vector<1x16xf32>
    %42 = vector.broadcast %40 : vector<4x1xf32> to vector<4x16xf32>
    %43 = vector.broadcast %41 : vector<1x16xf32> to vector<4x16xf32>
    %44 = arith.mulf %42, %43 : vector<4x16xf32>
    %45 = arith.addf %39, %44 : vector<4x16xf32>
    %c0_37 = arith.constant 0 : index
    %c2_38 = arith.constant 2 : index
    %46 = vector.load %arg4[%c0_37, %c2_38] : memref<4x12xf32, #tpu.memory_space<vmem>>, vector<4x1xf32>
    %c0_39 = arith.constant 0 : index
    %c2_40 = arith.constant 2 : index
    %47 = vector.load %arg10[%c0_39, %c2_40] : memref<4x18xf32, #tpu.memory_space<vmem>>, vector<1x16xf32>
    %48 = vector.broadcast %46 : vector<4x1xf32> to vector<4x16xf32>
    %49 = vector.broadcast %47 : vector<1x16xf32> to vector<4x16xf32>
    %50 = arith.mulf %48, %49 : vector<4x16xf32>
    %51 = arith.addf %45, %50 : vector<4x16xf32>
    %c0_41 = arith.constant 0 : index
    %c3 = arith.constant 3 : index
    %52 = vector.load %arg4[%c0_41, %c3] : memref<4x12xf32, #tpu.memory_space<vmem>>, vector<4x1xf32>
    %c1_42 = arith.constant 1 : index
    %c0_43 = arith.constant 0 : index
    %53 = vector.load %arg10[%c1_42, %c0_43] : memref<4x18xf32, #tpu.memory_space<vmem>>, vector<1x16xf32>
    %54 = vector.broadcast %52 : vector<4x1xf32> to vector<4x16xf32>
    %55 = vector.broadcast %53 : vector<1x16xf32> to vector<4x16xf32>
    %56 = arith.mulf %54, %55 : vector<4x16xf32>
    %57 = arith.addf %51, %56 : vector<4x16xf32>
    %c0_44 = arith.constant 0 : index
    %c4 = arith.constant 4 : index
    %58 = vector.load %arg4[%c0_44, %c4] : memref<4x12xf32, #tpu.memory_space<vmem>>, vector<4x1xf32>
    %c1_45 = arith.constant 1 : index
    %c1_46 = arith.constant 1 : index
    %59 = vector.load %arg10[%c1_45, %c1_46] : memref<4x18xf32, #tpu.memory_space<vmem>>, vector<1x16xf32>
    %60 = vector.broadcast %58 : vector<4x1xf32> to vector<4x16xf32>
    %61 = vector.broadcast %59 : vector<1x16xf32> to vector<4x16xf32>
    %62 = arith.mulf %60, %61 : vector<4x16xf32>
    %63 = arith.addf %57, %62 : vector<4x16xf32>
    %c0_47 = arith.constant 0 : index
    %c5 = arith.constant 5 : index
    %64 = vector.load %arg4[%c0_47, %c5] : memref<4x12xf32, #tpu.memory_space<vmem>>, vector<4x1xf32>
    %c1_48 = arith.constant 1 : index
    %c2_49 = arith.constant 2 : index
    %65 = vector.load %arg10[%c1_48, %c2_49] : memref<4x18xf32, #tpu.memory_space<vmem>>, vector<1x16xf32>
    %66 = vector.broadcast %64 : vector<4x1xf32> to vector<4x16xf32>
    %67 = vector.broadcast %65 : vector<1x16xf32> to vector<4x16xf32>
    %68 = arith.mulf %66, %67 : vector<4x16xf32>
    %69 = arith.addf %63, %68 : vector<4x16xf32>
    %c0_50 = arith.constant 0 : index
    %c6 = arith.constant 6 : index
    %70 = vector.load %arg4[%c0_50, %c6] : memref<4x12xf32, #tpu.memory_space<vmem>>, vector<4x1xf32>
    %c2_51 = arith.constant 2 : index
    %c0_52 = arith.constant 0 : index
    %71 = vector.load %arg10[%c2_51, %c0_52] : memref<4x18xf32, #tpu.memory_space<vmem>>, vector<1x16xf32>
    %72 = vector.broadcast %70 : vector<4x1xf32> to vector<4x16xf32>
    %73 = vector.broadcast %71 : vector<1x16xf32> to vector<4x16xf32>
    %74 = arith.mulf %72, %73 : vector<4x16xf32>
    %75 = arith.addf %69, %74 : vector<4x16xf32>
    %c0_53 = arith.constant 0 : index
    %c7 = arith.constant 7 : index
    %76 = vector.load %arg4[%c0_53, %c7] : memref<4x12xf32, #tpu.memory_space<vmem>>, vector<4x1xf32>
    %c2_54 = arith.constant 2 : index
    %c1_55 = arith.constant 1 : index
    %77 = vector.load %arg10[%c2_54, %c1_55] : memref<4x18xf32, #tpu.memory_space<vmem>>, vector<1x16xf32>
    %78 = vector.broadcast %76 : vector<4x1xf32> to vector<4x16xf32>
    %79 = vector.broadcast %77 : vector<1x16xf32> to vector<4x16xf32>
    %80 = arith.mulf %78, %79 : vector<4x16xf32>
    %81 = arith.addf %75, %80 : vector<4x16xf32>
    %c0_56 = arith.constant 0 : index
    %c8 = arith.constant 8 : index
    %82 = vector.load %arg4[%c0_56, %c8] : memref<4x12xf32, #tpu.memory_space<vmem>>, vector<4x1xf32>
    %c2_57 = arith.constant 2 : index
    %c2_58 = arith.constant 2 : index
    %83 = vector.load %arg10[%c2_57, %c2_58] : memref<4x18xf32, #tpu.memory_space<vmem>>, vector<1x16xf32>
    %84 = vector.broadcast %82 : vector<4x1xf32> to vector<4x16xf32>
    %85 = vector.broadcast %83 : vector<1x16xf32> to vector<4x16xf32>
    %86 = arith.mulf %84, %85 : vector<4x16xf32>
    %87 = arith.addf %81, %86 : vector<4x16xf32>
    %c0_59 = arith.constant 0 : index
    %c9 = arith.constant 9 : index
    %88 = vector.load %arg4[%c0_59, %c9] : memref<4x12xf32, #tpu.memory_space<vmem>>, vector<4x1xf32>
    %c3_60 = arith.constant 3 : index
    %c0_61 = arith.constant 0 : index
    %89 = vector.load %arg10[%c3_60, %c0_61] : memref<4x18xf32, #tpu.memory_space<vmem>>, vector<1x16xf32>
    %90 = vector.broadcast %88 : vector<4x1xf32> to vector<4x16xf32>
    %91 = vector.broadcast %89 : vector<1x16xf32> to vector<4x16xf32>
    %92 = arith.mulf %90, %91 : vector<4x16xf32>
    %93 = arith.addf %87, %92 : vector<4x16xf32>
    %c0_62 = arith.constant 0 : index
    %c10 = arith.constant 10 : index
    %94 = vector.load %arg4[%c0_62, %c10] : memref<4x12xf32, #tpu.memory_space<vmem>>, vector<4x1xf32>
    %c3_63 = arith.constant 3 : index
    %c1_64 = arith.constant 1 : index
    %95 = vector.load %arg10[%c3_63, %c1_64] : memref<4x18xf32, #tpu.memory_space<vmem>>, vector<1x16xf32>
    %96 = vector.broadcast %94 : vector<4x1xf32> to vector<4x16xf32>
    %97 = vector.broadcast %95 : vector<1x16xf32> to vector<4x16xf32>
    %98 = arith.mulf %96, %97 : vector<4x16xf32>
    %99 = arith.addf %93, %98 : vector<4x16xf32>
    %c0_65 = arith.constant 0 : index
    %c11 = arith.constant 11 : index
    %100 = vector.load %arg4[%c0_65, %c11] : memref<4x12xf32, #tpu.memory_space<vmem>>, vector<4x1xf32>
    %c3_66 = arith.constant 3 : index
    %c2_67 = arith.constant 2 : index
    %101 = vector.load %arg10[%c3_66, %c2_67] : memref<4x18xf32, #tpu.memory_space<vmem>>, vector<1x16xf32>
    %102 = vector.broadcast %100 : vector<4x1xf32> to vector<4x16xf32>
    %103 = vector.broadcast %101 : vector<1x16xf32> to vector<4x16xf32>
    %104 = arith.mulf %102, %103 : vector<4x16xf32>
    %105 = arith.addf %99, %104 : vector<4x16xf32>
    %c0_68 = arith.constant 0 : index
    %c0_69 = arith.constant 0 : index
    %106 = vector.load %arg7[%c0_68, %c0_69] : memref<4x1xf32, #tpu.memory_space<vmem>>, vector<4x1xf32>
    %c0_70 = arith.constant 0 : index
    %c0_71 = arith.constant 0 : index
    %107 = vector.load %arg6[%c0_70, %c0_71] : memref<4x1xf32, #tpu.memory_space<vmem>>, vector<4x1xf32>
    %108 = vector.broadcast %107 : vector<4x1xf32> to vector<4x16xf32>
    %109 = vector.broadcast %1 : vector<1x16xf32> to vector<4x16xf32>
    %110 = arith.mulf %108, %109 : vector<4x16xf32>
    %111 = vector.broadcast %106 : vector<4x1xf32> to vector<4x16xf32>
    %112 = arith.addf %111, %110 : vector<4x16xf32>
    %113 = arith.addf %105, %112 : vector<4x16xf32>
    %c0_72 = arith.constant 0 : index
    %c0_73 = arith.constant 0 : index
    %c0_74 = arith.constant 0 : index
    %114 = vector.load %arg8[%c0_72, %c0_73, %c0_74] : memref<1x4x16xf32, #tpu.memory_space<vmem>>, vector<1x4x16xf32>
    %115 = vector.shape_cast %114 : vector<1x4x16xf32> to vector<4x16xf32>
    %116 = vector.shape_cast %113 : vector<4x16xf32> to vector<1x4x16xf32>
    tpu.vector_store %arg8[%c0_72, %c0_73, %c0_74], %116 {strides = array<i32>} : memref<1x4x16xf32, #tpu.memory_space<vmem>>, vector<1x4x16xf32>,
    return
  }
  func.func @transform_0(%arg0: i32) -> (i32, i32, i32) {
    %c0_i32 = arith.constant 0 : i32
    %c0_i32_0 = arith.constant 0 : i32
    %c0_i32_1 = arith.constant 0 : i32
    return %arg0, %c0_i32, %c0_i32_0 : i32, i32, i32
  }
  func.func @transform_1(%arg0: i32) -> (i32, i32) {
    %c0_i32 = arith.constant 0 : i32
    %c0_i32_0 = arith.constant 0 : i32
    %c0_i32_1 = arith.constant 0 : i32
    return %c0_i32, %c0_i32_0 : i32, i32
  }
  func.func @transform_2(%arg0: i32) -> (i32, i32) {
    %c0_i32 = arith.constant 0 : i32
    %c0_i32_0 = arith.constant 0 : i32
    %c0_i32_1 = arith.constant 0 : i32
    return %c0_i32, %c0_i32_0 : i32, i32
  }
  func.func @transform_3(%arg0: i32) -> (i32, i32) {
    %c0_i32 = arith.constant 0 : i32
    %c0_i32_0 = arith.constant 0 : i32
    %c0_i32_1 = arith.constant 0 : i32
    return %c0_i32, %c0_i32_0 : i32, i32
  }
  func.func @transform_4(%arg0: i32) -> (i32, i32) {
    %c0_i32 = arith.constant 0 : i32
    %c0_i32_0 = arith.constant 0 : i32
    %c0_i32_1 = arith.constant 0 : i32
    return %c0_i32, %c0_i32_0 : i32, i32
  }
  func.func @transform_5(%arg0: i32) -> (i32, i32) {
    %c0_i32 = arith.constant 0 : i32
    %c0_i32_0 = arith.constant 0 : i32
    %c0_i32_1 = arith.constant 0 : i32
    return %c0_i32, %c0_i32_0 : i32, i32
  }
  func.func @transform_6(%arg0: i32) -> (i32, i32) {
    %c0_i32 = arith.constant 0 : i32
    %c0_i32_0 = arith.constant 0 : i32
    %c0_i32_1 = arith.constant 0 : i32
    return %c0_i32, %c0_i32_0 : i32, i32
  }
  func.func @transform_7(%arg0: i32) -> (i32, i32, i32) {
    %c0_i32 = arith.constant 0 : i32
    %c0_i32_0 = arith.constant 0 : i32
    %c0_i32_1 = arith.constant 0 : i32
    return %arg0, %c0_i32, %c0_i32_0 : i32, i32, i32
  }
}

</mosaic_0001>

<llo_original>
// kernel: tpu_custom_call.1
$region0: #{tpu_custom_call.1}
  #allocation0 [shape = 'u32[]', space=smem, size = 0x4, offset = 0x4, fixed_abs, tag = 'smem constant byte address 0x4 - core index']
  #allocation1 [shape = 'u32[144,128]{1,0:T(1,128)}', space=vmem, size = 0x12000, scoped, tag = 'internal scratch']
  #allocation2 [shape = 'f32[1,18]{1,0:T(1,128)}', space=vmem, size = 0x200, scoped, tag = 'scratch operand']
  #allocation3 [shape = 'f32[4,18]{1,0:T(4,128)}', space=vmem, size = 0x800, scoped, tag = 'scratch operand']
  %s0 = inlined_call_operand.vmem [shape: f32[2,1,16], index: 0, kind: input, shape index: {}]
  %s1 = inlined_call_operand.vmem [shape: f32[4,3], index: 1, kind: input, shape index: {}]
  %s2 = inlined_call_operand.vmem [shape: f32[4,1], index: 2, kind: input, shape index: {}]
  %s3 = inlined_call_operand.vmem [shape: f32[4,12], index: 3, kind: input, shape index: {}]
  %s4 = inlined_call_operand.vmem [shape: f32[4,1], index: 4, kind: input, shape index: {}]
  %s5 = inlined_call_operand.vmem [shape: f32[4,1], index: 5, kind: input, shape index: {}]
  %s6 = inlined_call_operand.vmem [shape: f32[4,1], index: 6, kind: input, shape index: {}]
  %s7 = inlined_call_operand.hbm [shape: f32[2,4,16], index: 7, kind: output, shape index: {}]
  %s8 = sld [smem:[#allocation0]]
  $region61: #{tpu_custom_call.1} parent=0
    _
  %s10 = ssub.s32 1, %s8
  %s11 = scalar_select 0, %s10, %s8
  $region1: #{tpu_custom_call.1} parent=0
    #allocation4 [shape = 'u8[4096]{0}', space=vmem, size = 0x1000, scoped, tag = 'output window, operand 0']
    #allocation5 [shape = 's32[2]{0}', space=sflag, size = 0x8, scoped, tag = 'scoped memory for tpu_custom_call.1']
    %12 = vsyncpa [#allocation5], 0
    %s13 = scalar_lea.sflag [#allocation5], 1
    %14 = vsyncpa %s13, 0
    loop: start=0, step=1, limit=4
    $region2: #{tpu_custom_call.1} parent=1 // loop_pre_header
      _
    $region3: #{tpu_custom_call.1} parent=1 // loop_header
      %s16 = sphi 0, %s20
      %p17 = scmp.ge.s32.totalorder %s16, 4
      %s26 = sphi 0, %s28
      %s29 = sphi 0, %s26
      %s30 = sphi 0, %s29
      %s46 = sphi 0, %s30
      %s50 = sphi 0, %s50
      %s52 = sphi 0, %s50
      %s53 = sphi 0, %s52
      %s67 = sphi 0, %s53
      %s71 = sphi 0, %s71
      %s73 = sphi 0, %s71
      %s74 = sphi 0, %s73
      %s88 = sphi 0, %s74
      %s92 = sphi 0, %s92
      %s94 = sphi 0, %s92
      %s95 = sphi 0, %s94
      %s109 = sphi 0, %s95
      %s113 = sphi 0, %s113
      %s115 = sphi 0, %s113
      %s116 = sphi 0, %s115
      %s130 = sphi 0, %s116
      %s134 = sphi 0, %s134
      %s136 = sphi 0, %s134
      %s137 = sphi 0, %s136
      %s151 = sphi 0, %s137
      %s155 = sphi 0, %s155
      %s157 = sphi 0, %s155
      %s158 = sphi 0, %s157
      %s172 = sphi 0, %s158
      %s178 = sphi 0, %s180
      %s181 = sphi 0, %s178
      %s182 = sphi 0, %s181
      %s198 = sphi 0, %s182
    $region4: #{tpu_custom_call.1} parent=1 // loop_header_branch
      %19 = sbr.rel (%p17) target = $region8
    $region5: #{tpu_custom_call.1} parent=1 // loop_body
      %s21 = ssub.s32 %s16, 1
      %s22 = ssub.s32 %s16, 2
      %s23 = sadd.s32 %s16, 1
      %s24 = ssub.s32 %s16, %s23
      %p25 = scmp.eq.s32.totalorder %s24, 0
      %s27 = sadd.s32 %s26, 1
      %s28 = scalar_select %p25, %s26, %s27
      %p31 = pneg %p25
      %p32 = scmp.eq.s32.totalorder %s16, 1
      %p33 = por %p31, %p32
      %p34 = scmp.ne.s32.totalorder %s26, %s29
      %p35 = scmp.eq.s32.totalorder %s16, 0
      %p36 = por %p34, %p35
      %p37 = scmp.ne.s32.totalorder %s26, %s29
      %p38 = scmp.eq.s32.totalorder %s21, 1
      %p39 = por %p37, %p38
      %p40 = scmp.ne.s32.totalorder %s29, %s30
      %p41 = scmp.eq.s32.totalorder %s21, 0
      %p42 = por %p40, %p41
      %p43 = scmp.ne.s32.totalorder %s29, %s30
      %p44 = scmp.eq.s32.totalorder %s22, 1
      %p45 = por %p43, %p44
      %p47 = scmp.ne.s32.totalorder %s30, %s46
      %p48 = scmp.eq.s32.totalorder %s22, 0
      %p49 = por %p47, %p48
      %s51 = sadd.s32 %s50, 1
      %p54 = scmp.eq.s32.totalorder %s16, 1
      %p55 = scmp.ne.s32.totalorder %s50, %s52
      %p56 = scmp.eq.s32.totalorder %s16, 0
      %p57 = por %p55, %p56
      %p58 = scmp.ne.s32.totalorder %s50, %s52
      %p59 = scmp.eq.s32.totalorder %s21, 1
      %p60 = por %p58, %p59
      %p61 = scmp.ne.s32.totalorder %s52, %s53
      %p62 = scmp.eq.s32.totalorder %s21, 0
      %p63 = por %p61, %p62
      %p64 = scmp.ne.s32.totalorder %s52, %s53
      %p65 = scmp.eq.s32.totalorder %s22, 1
      %p66 = por %p64, %p65
      %p68 = scmp.ne.s32.totalorder %s53, %s67
      %p69 = scmp.eq.s32.totalorder %s22, 0
      %p70 = por %p68, %p69
      %s72 = sadd.s32 %s71, 1
      %p75 = scmp.eq.s32.totalorder %s16, 1
      %p76 = scmp.ne.s32.totalorder %s71, %s73
      %p77 = scmp.eq.s32.totalorder %s16, 0
      %p78 = por %p76, %p77
      %p79 = scmp.ne.s32.totalorder %s71, %s73
      %p80 = scmp.eq.s32.totalorder %s21, 1
      %p81 = por %p79, %p80
      %p82 = scmp.ne.s32.totalorder %s73, %s74
      %p83 = scmp.eq.s32.totalorder %s21, 0
      %p84 = por %p82, %p83
      %p85 = scmp.ne.s32.totalorder %s73, %s74
      %p86 = scmp.eq.s32.totalorder %s22, 1
      %p87 = por %p85, %p86
      %p89 = scmp.ne.s32.totalorder %s74, %s88
      %p90 = scmp.eq.s32.totalorder %s22, 0
      %p91 = por %p89, %p90
      %s93 = sadd.s32 %s92, 1
      %p96 = scmp.eq.s32.totalorder %s16, 1
      %p97 = scmp.ne.s32.totalorder %s92, %s94
      %p98 = scmp.eq.s32.totalorder %s16, 0
      %p99 = por %p97, %p98
      %p100 = scmp.ne.s32.totalorder %s92, %s94
      %p101 = scmp.eq.s32.totalorder %s21, 1
      %p102 = por %p100, %p101
      %p103 = scmp.ne.s32.totalorder %s94, %s95
      %p104 = scmp.eq.s32.totalorder %s21, 0
      %p105 = por %p103, %p104
      %p106 = scmp.ne.s32.totalorder %s94, %s95
      %p107 = scmp.eq.s32.totalorder %s22, 1
      %p108 = por %p106, %p107
      %p110 = scmp.ne.s32.totalorder %s95, %s109
      %p111 = scmp.eq.s32.totalorder %s22, 0
      %p112 = por %p110, %p111
      %s114 = sadd.s32 %s113, 1
      %p117 = scmp.eq.s32.totalorder %s16, 1
      %p118 = scmp.ne.s32.totalorder %s113, %s115
      %p119 = scmp.eq.s32.totalorder %s16, 0
      %p120 = por %p118, %p119
      %p121 = scmp.ne.s32.totalorder %s113, %s115
      %p122 = scmp.eq.s32.totalorder %s21, 1
      %p123 = por %p121, %p122
      %p124 = scmp.ne.s32.totalorder %s115, %s116
      %p125 = scmp.eq.s32.totalorder %s21, 0
      %p126 = por %p124, %p125
      %p127 = scmp.ne.s32.totalorder %s115, %s116
      %p128 = scmp.eq.s32.totalorder %s22, 1
      %p129 = por %p127, %p128
      %p131 = scmp.ne.s32.totalorder %s116, %s130
      %p132 = scmp.eq.s32.totalorder %s22, 0
      %p133 = por %p131, %p132
      %s135 = sadd.s32 %s134, 1
      %p138 = scmp.eq.s32.totalorder %s16, 1
      %p139 = scmp.ne.s32.totalorder %s134, %s136
      %p140 = scmp.eq.s32.totalorder %s16, 0
      %p141 = por %p139, %p140
      %p142 = scmp.ne.s32.totalorder %s134, %s136
      %p143 = scmp.eq.s32.totalorder %s21, 1
      %p144 = por %p142, %p143
      %p145 = scmp.ne.s32.totalorder %s136, %s137
      %p146 = scmp.eq.s32.totalorder %s21, 0
      %p147 = por %p145, %p146
      %p148 = scmp.ne.s32.totalorder %s136, %s137
      %p149 = scmp.eq.s32.totalorder %s22, 1
      %p150 = por %p148, %p149
      %p152 = scmp.ne.s32.totalorder %s137, %s151
      %p153 = scmp.eq.s32.totalorder %s22, 0
      %p154 = por %p152, %p153
      %s156 = sadd.s32 %s155, 1
      %p159 = scmp.eq.s32.totalorder %s16, 1
      %p160 = scmp.ne.s32.totalorder %s155, %s157
      %p161 = scmp.eq.s32.totalorder %s16, 0
      %p162 = por %p160, %p161
      %p163 = scmp.ne.s32.totalorder %s155, %s157
      %p164 = scmp.eq.s32.totalorder %s21, 1
      %p165 = por %p163, %p164
      %p166 = scmp.ne.s32.totalorder %s157, %s158
      %p167 = scmp.eq.s32.totalorder %s21, 0
      %p168 = por %p166, %p167
      %p169 = scmp.ne.s32.totalorder %s157, %s158
      %p170 = scmp.eq.s32.totalorder %s22, 1
      %p171 = por %p169, %p170
      %p173 = scmp.ne.s32.totalorder %s158, %s172
      %p174 = scmp.eq.s32.totalorder %s22, 0
      %p175 = por %p173, %p174
      %s176 = ssub.s32 %s16, %s23
      %p177 = scmp.eq.s32.totalorder %s176, 0
      %s179 = sadd.s32 %s178, 1
      %s180 = scalar_select %p177, %s178, %s179
      %p183 = pneg %p177
      %p184 = scmp.eq.s32.totalorder %s16, 1
      %p185 = por %p183, %p184
      %p186 = scmp.ne.s32.totalorder %s178, %s181
      %p187 = scmp.eq.s32.totalorder %s16, 0
      %p188 = por %p186, %p187
      %p189 = scmp.ne.s32.totalorder %s178, %s181
      %p190 = scmp.eq.s32.totalorder %s21, 1
      %p191 = por %p189, %p190
      %p192 = scmp.ne.s32.totalorder %s181, %s182
      %p193 = scmp.eq.s32.totalorder %s21, 0
      %p194 = por %p192, %p193
      %p195 = scmp.ne.s32.totalorder %s181, %s182
      %p196 = scmp.eq.s32.totalorder %s22, 1
      %p197 = por %p195, %p196
      %p199 = scmp.ne.s32.totalorder %s182, %s198
      %p200 = scmp.eq.s32.totalorder %s22, 0
      %p201 = por %p199, %p200
      %p202 = scmp.le.s32.totalorder 1, %s16
      %p203 = scmp.lt.s32.totalorder %s16, 3
      %p204 = pnand %p202, %p203
      %p205 = pneg %p204
      // Predicated region
      $region9: #{tpu_custom_call.1} parent=5 // pred_check
        _
      $region10: #{tpu_custom_call.1} parent=5 // pred_check_branch
        %207 = sbr.rel (%p204) target = $region12
      $region11: #{tpu_custom_call.1} parent=5 // pred_region
        %s208 = ssub.s32 %s16, 1
        // Predicated region
        $region13: #{tpu_custom_call.1} parent=11 // pred_check
          %p209 = pneg %p63
        $region14: #{tpu_custom_call.1} parent=11 // pred_check_branch
          %211 = sbr.rel (%p209) target = $region16
        $region15: #{tpu_custom_call.1} parent=11 // pred_region
          _
        $region16: #{tpu_custom_call.1} parent=11 // pred_fallthru
          _
        // Predicated region
        $region17: #{tpu_custom_call.1} parent=11 // pred_check
          %p212 = pneg %p84
        $region18: #{tpu_custom_call.1} parent=11 // pred_check_branch
          %214 = sbr.rel (%p212) target = $region20
        $region19: #{tpu_custom_call.1} parent=11 // pred_region
          _
        $region20: #{tpu_custom_call.1} parent=11 // pred_fallthru
          _
        // Predicated region
        $region21: #{tpu_custom_call.1} parent=11 // pred_check
          %p215 = pneg %p105
        $region22: #{tpu_custom_call.1} parent=11 // pred_check_branch
          %217 = sbr.rel (%p215) target = $region24
        $region23: #{tpu_custom_call.1} parent=11 // pred_region
          _
        $region24: #{tpu_custom_call.1} parent=11 // pred_fallthru
          _
        // Predicated region
        $region25: #{tpu_custom_call.1} parent=11 // pred_check
          %p218 = pneg %p126
        $region26: #{tpu_custom_call.1} parent=11 // pred_check_branch
          %220 = sbr.rel (%p218) target = $region28
        $region27: #{tpu_custom_call.1} parent=11 // pred_region
          _
        $region28: #{tpu_custom_call.1} parent=11 // pred_fallthru
          _
        // Predicated region
        $region29: #{tpu_custom_call.1} parent=11 // pred_check
          %p221 = pneg %p147
        $region30: #{tpu_custom_call.1} parent=11 // pred_check_branch
          %223 = sbr.rel (%p221) target = $region32
        $region31: #{tpu_custom_call.1} parent=11 // pred_region
          _
        $region32: #{tpu_custom_call.1} parent=11 // pred_fallthru
          _
        // Predicated region
        $region33: #{tpu_custom_call.1} parent=11 // pred_check
          %p224 = pneg %p168
        $region34: #{tpu_custom_call.1} parent=11 // pred_check_branch
          %226 = sbr.rel (%p224) target = $region36
        $region35: #{tpu_custom_call.1} parent=11 // pred_region
          _
        $region36: #{tpu_custom_call.1} parent=11 // pred_fallthru
          _
      $region12: #{tpu_custom_call.1} parent=5 // pred_fallthru
        _
      %p227 = scmp.lt.s32.totalorder %s16, 2
      // Predicated region
      $region37: #{tpu_custom_call.1} parent=5 // pred_check
        %p228 = pneg %p227
      $region38: #{tpu_custom_call.1} parent=5 // pred_check_branch
        %230 = sbr.rel (%p228) target = $region40
      $region39: #{tpu_custom_call.1} parent=5 // pred_region
        // Predicated region
        $region41: #{tpu_custom_call.1} parent=39 // pred_check
          %p231 = pneg %p36
        $region42: #{tpu_custom_call.1} parent=39 // pred_check_branch
          %233 = sbr.rel (%p231) target = $region44
        $region43: #{tpu_custom_call.1} parent=39 // pred_region
          %p234 = scmp.lt.s32.totalorder %s16, 1
          %s235 = scalar_select %p234, %s16, 1
          %s236 = scalar_lea.vmem %s0, %s235
        $region44: #{tpu_custom_call.1} parent=39 // pred_fallthru
          _
      $region40: #{tpu_custom_call.1} parent=5 // pred_fallthru
        _
      %p237 = scmp.le.s32.totalorder 1, %s16
      %p238 = scmp.lt.s32.totalorder %s16, 3
      %p239 = pnand %p237, %p238
      %p240 = pneg %p239
      // Predicated region
      $region45: #{tpu_custom_call.1} parent=5 // pred_check
        _
      $region46: #{tpu_custom_call.1} parent=5 // pred_check_branch
        %242 = sbr.rel (%p239) target = $region48
      $region47: #{tpu_custom_call.1} parent=5 // pred_region
        %s243 = ssub.s32 %s16, 1
        %p244 = scmp.lt.s32.totalorder %s21, 1
        %s245 = scalar_select %p244, %s21, 1
        %s246 = scalar_lea.vmem %s0, %s245
        %p247 = pneg %p42
        %p248 = pneg %p39
        %p249 = pneg %p63
        %p250 = pneg %p60
        %p251 = pneg %p84
        %p252 = pneg %p81
        %p253 = pneg %p105
        %p254 = pneg %p102
        %p255 = pneg %p126
        %p256 = pneg %p123
        %p257 = pneg %p147
        %p258 = pneg %p144
        %p259 = pneg %p168
        %p260 = pneg %p165
        %p261 = pneg %p194
        %p262 = pneg %p191
        %s263 = sand.u32 %s181, 1
        %s264 = scalar_lea.sflag [#allocation5], %s263
        %s265 = sand.u32 %s181, 1
        %s266 = smul.addr %s265, 4
        %s267 = scalar_lea.vmem [#allocation4], %s266
        %p268 = scmp.lt.s32.totalorder %s21, 1
        %s269 = scalar_select %p268, %s21, 1
        %s270 = scalar_lea.vmem %s0, %s269
        %v271 = vld [vmem:[%s270] sm:$0x1]
        %vm272 = vcmask 0
        %273 = vst.msk [vmem:[#allocation2] sm:$0x1] %vm272, 0.0
        %vm274 = vcmask 139400
        %275 = vst.msk [vmem:[#allocation2] sm:$0x1] %vm274, 0.0
        %v277 = vlaneseq
        %v278 = vshrl.u32 %v277, 7
        %v279 = vsub.s32 0, %v278
        %v280 = vrot.slane %v271, %v279
        %281 = vrot.lane.b32.xlu0 %v280, 1
        %v282 = vpop.permute.xlu0 %281
        %vm284 = vcmask 131080
        %285 = vst.msk [vmem:[#allocation2] sm:$0x1] %vm284, %v282
        %vm286 = vcmask 3072
        %287 = vst.msk [vmem:[#allocation3] sm:$0xf] %vm286, 0.0
        %vm288 = vcmask 142472
        %289 = vst.msk [vmem:[#allocation3] sm:$0xf] %vm288, 0.0
        %v290 = vld [vmem:[%s2] sm:$0xf]
        %v291 = vld [vmem:[%s1] sm:$0xf]
        %v292 = vld [vmem:[#allocation2] sm:$0x1]
        %294 = vset.pattern.permute.xlu0 0
        %295 = vperm.xlu0 %294, %v291
        %v296 = vpop.permute.xlu0 %295
        %v299 = vlaneseq
        %v300 = vshrl.u32 %v299, 7
        %v301 = vsub.s32 0, %v300
        %v302 = vrot.slane %v292, %v301
        %v304 = vmul.f32 %v296, %v302
        %306 = vset.pattern.permute.xlu0 0
        %307 = vperm.xlu0 %306, %v290
        %v308 = vpop.permute.xlu0 %307
        %v310 = vadd.f32 %v308, %v304
        %311 = vset.pattern.permute.xlu0 1
        %312 = vperm.xlu0 %311, %v291
        %v313 = vpop.permute.xlu0 %312
        %v315 = vmul.f32 %v313, %v302
        %317 = vrot.lane.b32.xlu0 %v315, 127
        %v318 = vpop.permute.xlu0 %317
        %v320 = vadd.f32 %v310, %v318
        %321 = vset.pattern.permute.xlu0 2
        %322 = vperm.xlu0 %321, %v291
        %v323 = vpop.permute.xlu0 %322
        %v325 = vmul.f32 %v323, %v302
        %327 = vrot.lane.b32.xlu0 %v325, 126
        %v328 = vpop.permute.xlu0 %327
        %v330 = vadd.f32 %v320, %v328
        %v331 = vmax.f32 %v330, 0.0
        %333 = vrot.lane.b32.xlu0 %v331, 1
        %v334 = vpop.permute.xlu0 %333
        %vm336 = vcmask 134152
        %337 = vst.msk [vmem:[#allocation3] sm:$0xf] %vm336, %v334
        %v338 = vld [vmem:[%s4] sm:$0xf]
        %v339 = vld [vmem:[%s3] sm:$0xf]
        %v340 = vld [vmem:[#allocation3] sm:$0x1]
        %342 = vset.pattern.permute.xlu0 0
        %343 = vperm.xlu0 %342, %v339
        %v344 = vpop.permute.xlu0 %343
        %v346 = vlaneseq
        %v347 = vshrl.u32 %v346, 7
        %v348 = vsub.s32 0, %v347
        %v349 = vrot.slane %v340, %v348
        %v350 = vmul.f32 %v344, %v349
        %352 = vset.pattern.permute.xlu0 0
        %353 = vperm.xlu0 %352, %v338
        %v354 = vpop.permute.xlu0 %353
        %v356 = vadd.f32 %v354, %v350
        %357 = vset.pattern.permute.xlu0 1
        %358 = vperm.xlu0 %357, %v339
        %v359 = vpop.permute.xlu0 %358
        %v361 = vmul.f32 %v359, %v349
        %363 = vrot.lane.b32.xlu0 %v361, 127
        %v364 = vpop.permute.xlu0 %363
        %v366 = vadd.f32 %v356, %v364
        %367 = vset.pattern.permute.xlu0 2
        %368 = vperm.xlu0 %367, %v339
        %v369 = vpop.permute.xlu0 %368
        %v371 = vmul.f32 %v369, %v349
        %373 = vrot.lane.b32.xlu0 %v371, 126
        %v374 = vpop.permute.xlu0 %373
        %v376 = vadd.f32 %v366, %v374
        %v377 = vld [vmem:[#allocation3 + $0x1] sm:$0x1]
        %378 = vset.pattern.permute.xlu0 3
        %379 = vperm.xlu0 %378, %v339
        %v380 = vpop.permute.xlu0 %379
        %v382 = vlaneseq
        %v383 = vshrl.u32 %v382, 7
        %v384 = vsub.s32 0, %v383
        %v385 = vrot.slane %v377, %v384
        %v386 = vmul.f32 %v380, %v385
        %v387 = vadd.f32 %v376, %v386
        %388 = vset.pattern.permute.xlu0 4
        %389 = vperm.xlu0 %388, %v339
        %v390 = vpop.permute.xlu0 %389
        %v392 = vmul.f32 %v390, %v385
        %394 = vrot.lane.b32.xlu0 %v392, 127
        %v395 = vpop.permute.xlu0 %394
        %v397 = vadd.f32 %v387, %v395
        %398 = vset.pattern.permute.xlu0 5
        %399 = vperm.xlu0 %398, %v339
        %v400 = vpop.permute.xlu0 %399
        %v402 = vmul.f32 %v400, %v385
        %404 = vrot.lane.b32.xlu0 %v402, 126
        %v405 = vpop.permute.xlu0 %404
        %v407 = vadd.f32 %v397, %v405
        %v408 = vld [vmem:[#allocation3 + $0x2] sm:$0x1]
        %409 = vset.pattern.permute.xlu0 6
        %410 = vperm.xlu0 %409, %v339
        %v411 = vpop.permute.xlu0 %410
        %v413 = vlaneseq
        %v414 = vshrl.u32 %v413, 7
        %v415 = vsub.s32 0, %v414
        %v416 = vrot.slane %v408, %v415
        %v417 = vmul.f32 %v411, %v416
        %v418 = vadd.f32 %v407, %v417
        %419 = vset.pattern.permute.xlu0 7
        %420 = vperm.xlu0 %419, %v339
        %v421 = vpop.permute.xlu0 %420
        %v423 = vmul.f32 %v421, %v416
        %425 = vrot.lane.b32.xlu0 %v423, 127
        %v426 = vpop.permute.xlu0 %425
        %v428 = vadd.f32 %v418, %v426
        %429 = vset.pattern.permute.xlu0 8
        %430 = vperm.xlu0 %429, %v339
        %v431 = vpop.permute.xlu0 %430
        %v433 = vmul.f32 %v431, %v416
        %435 = vrot.lane.b32.xlu0 %v433, 126
        %v436 = vpop.permute.xlu0 %435
        %v438 = vadd.f32 %v428, %v436
        %v439 = vld [vmem:[#allocation3 + $0x3] sm:$0x1]
        %440 = vset.pattern.permute.xlu0 9
        %441 = vperm.xlu0 %440, %v339
        %v442 = vpop.permute.xlu0 %441
        %v444 = vlaneseq
        %v445 = vshrl.u32 %v444, 7
        %v446 = vsub.s32 0, %v445
        %v447 = vrot.slane %v439, %v446
        %v448 = vmul.f32 %v442, %v447
        %v449 = vadd.f32 %v438, %v448
        %450 = vset.pattern.permute.xlu0 10
        %451 = vperm.xlu0 %450, %v339
        %v452 = vpop.permute.xlu0 %451
        %v454 = vmul.f32 %v452, %v447
        %456 = vrot.lane.b32.xlu0 %v454, 127
        %v457 = vpop.permute.xlu0 %456
        %v459 = vadd.f32 %v449, %v457
        %460 = vset.pattern.permute.xlu0 11
        %461 = vperm.xlu0 %460, %v339
        %v462 = vpop.permute.xlu0 %461
        %v464 = vmul.f32 %v462, %v447
        %466 = vrot.lane.b32.xlu0 %v464, 126
        %v467 = vpop.permute.xlu0 %466
        %v469 = vadd.f32 %v459, %v467
        %v470 = vld [vmem:[%s6] sm:$0xf]
        %v471 = vld [vmem:[%s5] sm:$0xf]
        %473 = vset.pattern.permute.xlu0 0
        %474 = vperm.xlu0 %473, %v471
        %v475 = vpop.permute.xlu0 %474
        %v478 = vmul.f32 %v475, %v280
        %480 = vset.pattern.permute.xlu0 0
        %481 = vperm.xlu0 %480, %v470
        %v482 = vpop.permute.xlu0 %481
        %v484 = vadd.f32 %v482, %v478
        %v485 = vadd.f32 %v469, %v484
        %vm486 = vcmask 125952
        %487 = vst.msk [vmem:[%s267] sm:$0xf] %vm486, %v485
        %s488 = sand.u32 %s181, 1
        %s489 = scalar_lea.sflag [#allocation5], %s488
        %s490 = sand.u32 %s181, 1
        %s491 = smul.addr %s490, 4
        %s492 = scalar_lea.vmem [#allocation4], %s491
        // Predicated region
        $region49: #{tpu_custom_call.1} parent=47 // pred_check
          %p493 = pneg %p191
        $region50: #{tpu_custom_call.1} parent=47 // pred_check_branch
          %495 = sbr.rel (%p493) target = $region52
        $region51: #{tpu_custom_call.1} parent=47 // pred_region
          %s497 = ssub.s32 64, 64
          %498 = vsyncadd %s489, %s497
          %s499 = smul.addr %s21, 64
          %s500 = scalar_lea.hbm %s7, %s499
          %s502 = sshll.u32 %s492, 4
          %s503 = int_to_ptr.vmem [resolvable:$true] %s502
          %505 = dma.vmem_to_hbm [thread:$0]  %s503, 64, %s500, %s489
        $region52: #{tpu_custom_call.1} parent=47 // pred_fallthru
          _
      $region48: #{tpu_custom_call.1} parent=5 // pred_fallthru
        _
      %p506 = scmp.le.s32.totalorder 2, %s16
      // Predicated region
      $region53: #{tpu_custom_call.1} parent=5 // pred_check
        %p507 = pneg %p506
      $region54: #{tpu_custom_call.1} parent=5 // pred_check_branch
        %509 = sbr.rel (%p507) target = $region56
      $region55: #{tpu_custom_call.1} parent=5 // pred_region
        %s510 = ssub.s32 %s16, 2
        // Predicated region
        $region57: #{tpu_custom_call.1} parent=55 // pred_check
          %p511 = pneg %p197
        $region58: #{tpu_custom_call.1} parent=55 // pred_check_branch
          %513 = sbr.rel (%p511) target = $region60
        $region59: #{tpu_custom_call.1} parent=55 // pred_region
          %s514 = sand.u32 %s182, 1
          %s515 = scalar_lea.sflag [#allocation5], %s514
          %s516 = sand.u32 %s182, 1
          %s517 = smul.addr %s516, 4
          %s518 = scalar_lea.vmem [#allocation4], %s517
          %519 = dma.done %s515, 64
        $region60: #{tpu_custom_call.1} parent=55 // pred_fallthru
          _
      $region56: #{tpu_custom_call.1} parent=5 // pred_fallthru
        _
    $region6: #{tpu_custom_call.1} parent=1 // loop_footer
      %s20 = sadd.s32 1, %s16
    $region7: #{tpu_custom_call.1} parent=1 // loop_footer_branch
      %15 = sbr.rel target = $region3
    $region8: #{tpu_custom_call.1} parent=1 // loop_exit
      _
    %520 = vsyncpa [#allocation5], 1
    %s521 = scalar_lea.sflag [#allocation5], 1
    %522 = vsyncpa %s521, 1

</llo_original>
